<compile_context>
chip_gen: v7x
topology: tpu7x:2x2x1
jax: 0.10.0
libtpu: 0.0.40
codegen_flags: <defaults>
</compile_context>

<pallas_src>
import math

import jax
import jax.numpy as jnp
from jax import lax
from jax.experimental import pallas as pl
from jax.experimental.pallas import tpu as pltpu


def _round_up(x, m):
    return ((x + m - 1) // m) * m


# ----------------------------- Pallas kernel ------------------------------ #
def _fused_matmul_kernel(a_ref, w_ref, o_ref):
    # a: (tm, Kf) compute dtype, w: (Kf, Ef) compute dtype -> o: (tm, Ef).
    # One MXU pass with f32 accumulation.  Bias is folded into `w` via the
    # indicator columns in `a`, so there is no epilogue work at all.
    o_ref[...] = jnp.dot(a_ref[...], w_ref[...],
                         preferred_element_type=jnp.float32).astype(o_ref.dtype)


def fused_matmul(a, w, *, out_dtype=jnp.float32, max_tm=512):
    """a: (Mf, Kf), w: (Kf, Ef) -> (Mf, Ef) out_dtype.

    Single pallas_call.  Kf and Ef are full-extent blocks (weight stays VMEM
    resident, no K grid axis); Mf is tiled only when it exceeds max_tm.
    VMEM (double-buffered): 2*tm*Kf*isz(a) + 2*Kf*Ef*isz(w) + 2*tm*Ef*isz(out)
    -- worst case with the defaults is well under 4 MiB, comfortably inside
    v7x's 64 MiB physical / 32 MiB default scoped limit.  Re-derive max_tm (or
    set vmem_limit_bytes) if Kf grows with much larger images/channels.
    """
    Mf, Kf = a.shape
    Kw, Ef = w.shape
    assert Kf == Kw
    if Mf <= max_tm:
        tm = Mf                                  # one full-extent block
    else:
        tm = max(16, (max_tm // 16) * 16)        # bf16 (16,128) sublane packing
    grid_m = pl.cdiv(Mf, tm)
    return pl.pallas_call(
        _fused_matmul_kernel,
        out_shape=jax.ShapeDtypeStruct((Mf, Ef), out_dtype),
        grid=(grid_m,),
        in_specs=[
            pl.BlockSpec((tm, Kf), lambda i: (i, 0)),   # activations: tile M
            pl.BlockSpec((Kf, Ef), lambda i: (0, 0)),   # weight: VMEM resident
        ],
        out_specs=pl.BlockSpec((tm, Ef), lambda i: (i, 0)),
        compiler_params=pltpu.CompilerParams(
            # Only meaningful once Mf is large enough for grid_m > 1 (large
            # batch); harmless for the single-step grid at default sizes.
            dimension_semantics=("parallel",),
        ),
    )(a, w)


# ------------------------------ glue (JAX) -------------------------------- #
def extract_patches(x, patch, stride):
    """x: (B, C, H, W) -> (B, nH*nW, C*patch*patch).

    Single strided gather; feature ordering is channel-major (c*p*p + i*p + j),
    matching PyTorch's Conv2d weight.reshape(E, C*p*p).
    """
    # TODO(synk): pulling this gather inside the pallas_call (x is only ~8 KB)
    # would remove one XLA op + a small HBM round trip per scale, but needs
    # in-kernel strided im2col assembly for arbitrary (p, s); left to XLA here.
    B, C, H, W = x.shape
    cols = lax.conv_general_dilated_patches(
        x, filter_shape=(patch, patch), window_strides=(stride, stride),
        padding="VALID", dimension_numbers=("NCHW", "OIHW", "NHWC"))
    nH = (H - patch) // stride + 1
    nW = (W - patch) // stride + 1
    return cols.reshape(B, nH * nW, C * patch * patch)


class PatchEmbedPallas:
    def __init__(self, img_size=16, patch_sizes=(8, 4), strides=(4, 2),
                 in_chans=4, embed_dim=32, norm_layer=None, flatten=True,
                 bias=True, key=None, compute_dtype=jnp.bfloat16,
                 out_dtype=jnp.float32):
        assert norm_layer is None, "norm_layer=None (Identity) path implemented"
        assert flatten, "flatten=True path implemented (matches default usage)"
        self.img_size = (img_size, img_size)
        self.patch_sizes = list(patch_sizes)
        self.strides = list(strides)
        self.in_chans = in_chans
        self.embed_dim = embed_dim
        self.compute_dtype = compute_dtype
        self.out_dtype = out_dtype
        self.n_scales = len(self.patch_sizes)
        self.num_patches = sum(
            ((img_size - p) // s + 1) ** 2
            for p, s in zip(self.patch_sizes, self.strides))

        # ---- lane-dense fold factor: F output columns of E lanes -> 128. ----
        E = embed_dim
        self.fold = 128 // E if (E < 128 and 128 % E == 0) else 1
        F = self.fold

        # ---- block-diagonal K layout (per-scale slot + bias indicators). ----
        self.k_sizes = [in_chans * p * p for p in self.patch_sizes]
        self.k_offsets, off = [], 0
        for k in self.k_sizes:
            self.k_offsets.append(off)
            off += k
        self.k_sum = off
        lane_mult = (128 // F) if F > 1 else 8     # make F*K_bd lane-aligned
        self.k_bd = _round_up(self.k_sum + self.n_scales, lane_mult)
        self.row_mult = 16 * F                     # pad M so folded rows align

        key = jax.random.PRNGKey(0) if key is None else key
        self.conv_weights = []   # (E, C, p, p) f32 masters (reference form)
        self.biases = []         # (E,) f32
        w_bd = jnp.zeros((self.k_bd, E), jnp.float32)
        for i, p in enumerate(self.patch_sizes):
            key, sub = jax.random.split(key)
            fan_in = in_chans * p * p
            std = 1.0 / math.sqrt(fan_in)  # kaiming_normal_, nonlinearity='linear'
            w = jax.random.normal(sub, (E, in_chans, p, p), jnp.float32) * std
            b = jnp.zeros((E,), jnp.float32)   # initialize_weights(): bias := 0
            self.conv_weights.append(w)
            self.biases.append(b)
            w_bd = w_bd.at[self.k_offsets[i]:self.k_offsets[i] + fan_in].set(
                w.reshape(E, fan_in).T)
            w_bd = w_bd.at[self.k_sum + i].set(b)   # bias row hit by indicator

        # ---- replicate block-diagonally F times -> (F*K_bd, F*E==128). ----
        w_big = jnp.zeros((F * self.k_bd, F * E), jnp.float32)
        for r in range(F):
            w_big = w_big.at[r * self.k_bd:(r + 1) * self.k_bd,
                             r * E:(r + 1) * E].set(w_bd)
        self.w_big = w_big.astype(compute_dtype)   # built ONCE (~360 KB bf16)

        # One jitted dispatch for the whole forward (gathers + one pallas_call).
        self._forward = jax.jit(self._forward_impl)

    def _forward_impl(self, x):
        B = x.shape[0]
        E, F = self.embed_dim, self.fold
        xc = x.astype(self.compute_dtype)   # bf16 activations: half the bytes
        row_blocks = []
        for i, (p, s) in enumerate(zip(self.patch_sizes, self.strides)):
            cols = extract_patches(xc, p, s)                 # (B, N_i, K_i)
            N, K = cols.shape[1], cols.shape[2]
            # Place into this scale's K slot; trailing one-hot carries the bias.
            ind = jnp.zeros((self.k_bd - self.k_sum,),
                            self.compute_dtype).at[i].set(1)
            row_blocks.append(jnp.concatenate([
                jnp.zeros((B, N, self.k_offsets[i]), self.compute_dtype),
                cols,
                jnp.zeros((B, N, self.k_sum - self.k_offsets[i] - K),
                          self.compute_dtype),
                jnp.broadcast_to(ind, (B, N, ind.shape[0])),
            ], axis=-1))
        # Row order == torch.cat(embeddings, dim=1) order.
        a = jnp.concatenate(row_blocks, axis=1)              # (B, Ntot, K_bd)
        M = B * self.num_patches
        m_pad = _round_up(M, self.row_mult)
        a = a.reshape(M, self.k_bd)
        if m_pad != M:
            a = jnp.concatenate(
                [a, jnp.zeros((m_pad - M, self.k_bd), self.compute_dtype)],
                axis=0)
        a_fold = a.reshape(m_pad // F, F * self.k_bd)        # free reshape
        out = fused_matmul(a_fold, self.w_big, out_dtype=self.out_dtype)
        # (m_pad//F, 128) is bit-identical to (m_pad, E) row-major.
        out = out.reshape(m_pad, E)[:M].reshape(B, self.num_patches, E)
        return out                                            # Identity norm

    def __call__(self, x):
        B, C, H, W = x.shape
        assert H == self.img_size[0] and W == self.img_size[1], (
            f"Input image size ({H}*{W}) doesn't match model "
            f"({self.img_size[0]}*{self.img_size[1]}).")
        return self._forward(x)


if __name__ == "__main__":
    key = jax.random.PRNGKey(0)
    k_x, k_w = jax.random.split(key)

    B, C, H = 2, 4, 16
    x = jax.random.normal(k_x, (B, C, H, H), jnp.float32)

    model = PatchEmbedPallas(img_size=H, patch_sizes=(8, 4), strides=(4, 2),
                             in_chans=C, embed_dim=32, key=k_w)
    y = jax.block_until_ready(model(x))

    # Reference: plain-JAX conv (NCHW / OIHW) in f32.
    def reference(m, x):
        refs = []
        for p, s, w, b in zip(m.patch_sizes, m.strides, m.conv_weights, m.biases):
            r = lax.conv_general_dilated(
                x, w, window_strides=(s, s), padding="VALID",
                dimension_numbers=("NCHW", "OIHW", "NCHW"))
            r = r + b[None, :, None, None]
            refs.append(r.reshape(x.shape[0], m.embed_dim, -1).transpose(0, 2, 1))
        return jnp.concatenate(refs, axis=1)

    ref = reference(model, x)
    assert y.shape == (B, model.num_patches, model.embed_dim), y.shape
    # bf16 inputs / f32 accumulation -> loosened tolerance vs the f32 reference.
    assert jnp.allclose(y, ref, atol=5e-2, rtol=5e-2), float(jnp.max(jnp.abs(y - ref)))

    # Tight structural check with an f32 compute path (same weights/key):
    # validates block-diagonal layout, bias-indicator fold, 4x lane-dense fold
    # and concat row ordering against the conv reference.
    model_f32 = PatchEmbedPallas(img_size=H, patch_sizes=(8, 4), strides=(4, 2),
                                 in_chans=C, embed_dim=32, key=k_w,
                                 compute_dtype=jnp.float32)
    y32 = jax.block_until_ready(model_f32(x))
    assert jnp.allclose(y32, ref, atol=1e-3, rtol=1e-3), float(jnp.max(jnp.abs(y32 - ref)))

    print("KERNEL_OK")
</pallas_src>

<mosaic_0001>
module attributes {stable_mosaic.version = 11 : i64} {
  func.func @_fused_matmul_kernel(%arg0: i32, %arg1: memref<32x1408xbf16, #tpu.memory_space<vmem>>, %arg2: memref<1408x128xbf16, #tpu.memory_space<vmem>>, %arg3: memref<32x128xf32, #tpu.memory_space<vmem>>) attributes {dimension_semantics = [#tpu.dimension_semantics<parallel>], iteration_bounds = array<i64: 1>, scalar_prefetch = 0 : i64, scratch_operands = 0 : i64, tpu.core_type = #tpu.core_type<tc>, window_params = [{transform_indices = @transform_0, window_bounds = array<i64: 32, 1408>}, {pipeline_mode = #tpu.pipeline_mode<synchronous>, transform_indices = @transform_1, window_bounds = array<i64: 1408, 128>}, {transform_indices = @transform_2, window_bounds = array<i64: 32, 128>}]} {
    %c0 = arith.constant 0 : index
    %c0_0 = arith.constant 0 : index
    %0 = vector.load %arg1[%c0, %c0_0] : memref<32x1408xbf16, #tpu.memory_space<vmem>>, vector<32x1408xbf16>
    %c0_1 = arith.constant 0 : index
    %c0_2 = arith.constant 0 : index
    %1 = vector.load %arg2[%c0_1, %c0_2] : memref<1408x128xbf16, #tpu.memory_space<vmem>>, vector<1408x128xbf16>
    %cst = arith.constant dense<0.000000e+00> : vector<32x128xf32>
    %2 = tpu.matmul %0, %1, %cst {dimension_numbers = #tpu.dot_dimension_numbers<[1], [0], [0], [1], [0, 0, 1, 1], [], []>} : vector<32x1408xbf16>, vector<1408x128xbf16>, vector<32x128xf32> -> vector<32x128xf32>
    %c0_3 = arith.constant 0 : index
    %c0_4 = arith.constant 0 : index
    %3 = vector.load %arg3[%c0_3, %c0_4] : memref<32x128xf32, #tpu.memory_space<vmem>>, vector<32x128xf32>
    tpu.vector_store %arg3[%c0_3, %c0_4], %2 {strides = array<i32>} : memref<32x128xf32, #tpu.memory_space<vmem>>, vector<32x128xf32>,
    return
  }
  func.func @transform_0(%arg0: i32) -> (i32, i32) {
    %c0_i32 = arith.constant 0 : i32
    %c0_i32_0 = arith.constant 0 : i32
    return %arg0, %c0_i32 : i32, i32
  }
  func.func @transform_1(%arg0: i32) -> (i32, i32) {
    %c0_i32 = arith.constant 0 : i32
    %c0_i32_0 = arith.constant 0 : i32
    %c0_i32_1 = arith.constant 0 : i32
    return %c0_i32, %c0_i32_0 : i32, i32
  }
  func.func @transform_2(%arg0: i32) -> (i32, i32) {
    %c0_i32 = arith.constant 0 : i32
    %c0_i32_0 = arith.constant 0 : i32
    return %arg0, %c0_i32 : i32, i32
  }
}

</mosaic_0001>

<llo_original>
// kernel: _forward_impl.1
$region0: #{_forward_impl.1}
  #allocation0 [shape = 'u32[]', space=smem, size = 0x4, offset = 0x4, fixed_abs, tag = 'smem constant byte address 0x4 - core index']
  #allocation1 [shape = 'u32[144,128]{1,0:T(1,128)}', space=vmem, size = 0x12000, scoped, tag = 'internal scratch']
  %s0 = inlined_call_operand.vmem [shape: bf16[32,1408], index: 0, kind: input, shape index: {}]
  %s1 = inlined_call_operand.vmem [shape: bf16[1408,128], index: 1, kind: input, shape index: {}]
  %s2 = inlined_call_operand.vmem [shape: f32[32,128], index: 2, kind: output, shape index: {}]
  %s3 = sld [smem:[#allocation0]]
  $region18: #{_forward_impl.1} parent=0
    _
  %s5 = ssub.s32 1, %s3
  %s6 = scalar_select 0, %s5, %s3
  // Predicated region
  $region2: #{_forward_impl.1} parent=0 // pred_check
    _
  $region3: #{_forward_impl.1} parent=0 // pred_check_branch
    %8 = sbr.rel (0) target = $region5
  $region4: #{_forward_impl.1} parent=0 // pred_region
    _
  $region5: #{_forward_impl.1} parent=0 // pred_fallthru
    _
  // Predicated region
  $region6: #{_forward_impl.1} parent=0 // pred_check
    _
  $region7: #{_forward_impl.1} parent=0 // pred_check_branch
    %10 = sbr.rel (0) target = $region9
  $region8: #{_forward_impl.1} parent=0 // pred_region
    _
  $region9: #{_forward_impl.1} parent=0 // pred_fallthru
    _
  %v12 = vld [vmem:[%s0] sm:$0xff]
  %v13 = vld [vmem:[%s0 + $0x8] sm:$0xff]
  %v14 = vld [vmem:[%s0 + $0x10] sm:$0xff]
  %v15 = vld [vmem:[%s0 + $0x18] sm:$0xff]
  %v16 = vld [vmem:[%s0 + $0x20] sm:$0xff]
  %v17 = vld [vmem:[%s0 + $0x28] sm:$0xf]
  %v18 = vld [vmem:[%s0 + $0x2c] sm:$0xff]
  %v19 = vld [vmem:[%s0 + $0x34] sm:$0xff]
  %v20 = vld [vmem:[%s0 + $0x3c] sm:$0xff]
  %v21 = vld [vmem:[%s0 + $0x44] sm:$0xff]
  %v22 = vld [vmem:[%s0 + $0x4c] sm:$0xff]
  %v23 = vld [vmem:[%s0 + $0x54] sm:$0xf]
  %v24 = vld [vmem:[%s0 + $0x58] sm:$0xff]
  %v25 = vld [vmem:[%s0 + $0x60] sm:$0xff]
  %v26 = vld [vmem:[%s0 + $0x68] sm:$0xff]
  %v27 = vld [vmem:[%s0 + $0x70] sm:$0xff]
  %v28 = vld [vmem:[%s0 + $0x78] sm:$0xff]
  %v29 = vld [vmem:[%s0 + $0x80] sm:$0xf]
  %v30 = vld [vmem:[%s0 + $0x84] sm:$0xff]
  %v31 = vld [vmem:[%s0 + $0x8c] sm:$0xff]
  %v32 = vld [vmem:[%s0 + $0x94] sm:$0xff]
  %v33 = vld [vmem:[%s0 + $0x9c] sm:$0xff]
  %v34 = vld [vmem:[%s0 + $0xa4] sm:$0xff]
  %v35 = vld [vmem:[%s0 + $0xac] sm:$0xf]
  %v36 = vld [vmem:[%s1] sm:$0xf]
  %v37 = vld [vmem:[%s1 + $0x4] sm:$0xf]
  %v38 = vld [vmem:[%s1 + $0x8] sm:$0xf]
  %v39 = vld [vmem:[%s1 + $0xc] sm:$0xf]
  %v40 = vld [vmem:[%s1 + $0x10] sm:$0xf]
  %v41 = vld [vmem:[%s1 + $0x14] sm:$0xf]
  %v42 = vld [vmem:[%s1 + $0x18] sm:$0xf]
  %v43 = vld [vmem:[%s1 + $0x1c] sm:$0xf]
  %v44 = vld [vmem:[%s1 + $0x20] sm:$0xf]
  %v45 = vld [vmem:[%s1 + $0x24] sm:$0xf]
  %v46 = vld [vmem:[%s1 + $0x28] sm:$0xf]
  %v47 = vld [vmem:[%s1 + $0x2c] sm:$0xf]
  %v48 = vld [vmem:[%s1 + $0x30] sm:$0xf]
  %v49 = vld [vmem:[%s1 + $0x34] sm:$0xf]
  %v50 = vld [vmem:[%s1 + $0x38] sm:$0xf]
  %v51 = vld [vmem:[%s1 + $0x3c] sm:$0xf]
  %v52 = vld [vmem:[%s1 + $0x40] sm:$0xf]
  %v53 = vld [vmem:[%s1 + $0x44] sm:$0xf]
  %v54 = vld [vmem:[%s1 + $0x48] sm:$0xf]
  %v55 = vld [vmem:[%s1 + $0x4c] sm:$0xf]
  %v56 = vld [vmem:[%s1 + $0x50] sm:$0xf]
  %v57 = vld [vmem:[%s1 + $0x54] sm:$0xf]
  %v58 = vld [vmem:[%s1 + $0x58] sm:$0xf]
  %v59 = vld [vmem:[%s1 + $0x5c] sm:$0xf]
  %v60 = vld [vmem:[%s1 + $0x60] sm:$0xf]
  %v61 = vld [vmem:[%s1 + $0x64] sm:$0xf]
  %v62 = vld [vmem:[%s1 + $0x68] sm:$0xf]
  %v63 = vld [vmem:[%s1 + $0x6c] sm:$0xf]
  %v64 = vld [vmem:[%s1 + $0x70] sm:$0xf]
  %v65 = vld [vmem:[%s1 + $0x74] sm:$0xf]
  %v66 = vld [vmem:[%s1 + $0x78] sm:$0xf]
  %v67 = vld [vmem:[%s1 + $0x7c] sm:$0xf]
  %v68 = vld [vmem:[%s1 + $0x80] sm:$0xf]
  %v69 = vld [vmem:[%s1 + $0x84] sm:$0xf]
  %v70 = vld [vmem:[%s1 + $0x88] sm:$0xf]
  %v71 = vld [vmem:[%s1 + $0x8c] sm:$0xf]
  %v72 = vld [vmem:[%s1 + $0x90] sm:$0xf]
  %v73 = vld [vmem:[%s1 + $0x94] sm:$0xf]
  %v74 = vld [vmem:[%s1 + $0x98] sm:$0xf]
  %v75 = vld [vmem:[%s1 + $0x9c] sm:$0xf]
  %v76 = vld [vmem:[%s1 + $0xa0] sm:$0xf]
  %v77 = vld [vmem:[%s1 + $0xa4] sm:$0xf]
  %v78 = vld [vmem:[%s1 + $0xa8] sm:$0xf]
  %v79 = vld [vmem:[%s1 + $0xac] sm:$0xf]
  %v80 = vld [vmem:[%s1 + $0xb0] sm:$0xf]
  %v81 = vld [vmem:[%s1 + $0xb4] sm:$0xf]
  %v82 = vld [vmem:[%s1 + $0xb8] sm:$0xf]
  %v83 = vld [vmem:[%s1 + $0xbc] sm:$0xf]
  %v84 = vld [vmem:[%s1 + $0xc0] sm:$0xf]
  %v85 = vld [vmem:[%s1 + $0xc4] sm:$0xf]
  %v86 = vld [vmem:[%s1 + $0xc8] sm:$0xf]
  %v87 = vld [vmem:[%s1 + $0xcc] sm:$0xf]
  %v88 = vld [vmem:[%s1 + $0xd0] sm:$0xf]
  %v89 = vld [vmem:[%s1 + $0xd4] sm:$0xf]
  %v90 = vld [vmem:[%s1 + $0xd8] sm:$0xf]
  %v91 = vld [vmem:[%s1 + $0xdc] sm:$0xf]
  %v92 = vld [vmem:[%s1 + $0xe0] sm:$0xf]
  %v93 = vld [vmem:[%s1 + $0xe4] sm:$0xf]
  %v94 = vld [vmem:[%s1 + $0xe8] sm:$0xf]
  %v95 = vld [vmem:[%s1 + $0xec] sm:$0xf]
  %v96 = vld [vmem:[%s1 + $0xf0] sm:$0xf]
  %v97 = vld [vmem:[%s1 + $0xf4] sm:$0xf]
  %v98 = vld [vmem:[%s1 + $0xf8] sm:$0xf]
  %v99 = vld [vmem:[%s1 + $0xfc] sm:$0xf]
  %v100 = vld [vmem:[%s1 + $0x100] sm:$0xf]
  %v101 = vld [vmem:[%s1 + $0x104] sm:$0xf]
  %v102 = vld [vmem:[%s1 + $0x108] sm:$0xf]
  %v103 = vld [vmem:[%s1 + $0x10c] sm:$0xf]
  %v104 = vld [vmem:[%s1 + $0x110] sm:$0xf]
  %v105 = vld [vmem:[%s1 + $0x114] sm:$0xf]
  %v106 = vld [vmem:[%s1 + $0x118] sm:$0xf]
  %v107 = vld [vmem:[%s1 + $0x11c] sm:$0xf]
  %v108 = vld [vmem:[%s1 + $0x120] sm:$0xf]
  %v109 = vld [vmem:[%s1 + $0x124] sm:$0xf]
  %v110 = vld [vmem:[%s1 + $0x128] sm:$0xf]
  %v111 = vld [vmem:[%s1 + $0x12c] sm:$0xf]
  %v112 = vld [vmem:[%s1 + $0x130] sm:$0xf]
  %v113 = vld [vmem:[%s1 + $0x134] sm:$0xf]
  %v114 = vld [vmem:[%s1 + $0x138] sm:$0xf]
  %v115 = vld [vmem:[%s1 + $0x13c] sm:$0xf]
  %v116 = vld [vmem:[%s1 + $0x140] sm:$0xf]
  %v117 = vld [vmem:[%s1 + $0x144] sm:$0xf]
  %v118 = vld [vmem:[%s1 + $0x148] sm:$0xf]
  %v119 = vld [vmem:[%s1 + $0x14c] sm:$0xf]
  %v120 = vld [vmem:[%s1 + $0x150] sm:$0xf]
  %v121 = vld [vmem:[%s1 + $0x154] sm:$0xf]
  %v122 = vld [vmem:[%s1 + $0x158] sm:$0xf]
  %v123 = vld [vmem:[%s1 + $0x15c] sm:$0xf]
  %v124 = vld [vmem:[%s1 + $0x160] sm:$0xf]
  %v125 = vld [vmem:[%s1 + $0x164] sm:$0xf]
  %v126 = vld [vmem:[%s1 + $0x168] sm:$0xf]
  %v127 = vld [vmem:[%s1 + $0x16c] sm:$0xf]
  %v128 = vld [vmem:[%s1 + $0x170] sm:$0xf]
  %v129 = vld [vmem:[%s1 + $0x174] sm:$0xf]
  %v130 = vld [vmem:[%s1 + $0x178] sm:$0xf]
  %v131 = vld [vmem:[%s1 + $0x17c] sm:$0xf]
  %v132 = vld [vmem:[%s1 + $0x180] sm:$0xf]
  %v133 = vld [vmem:[%s1 + $0x184] sm:$0xf]
  %v134 = vld [vmem:[%s1 + $0x188] sm:$0xf]
  %v135 = vld [vmem:[%s1 + $0x18c] sm:$0xf]
  %v136 = vld [vmem:[%s1 + $0x190] sm:$0xf]
  %v137 = vld [vmem:[%s1 + $0x194] sm:$0xf]
  %v138 = vld [vmem:[%s1 + $0x198] sm:$0xf]
  %v139 = vld [vmem:[%s1 + $0x19c] sm:$0xf]
  %v140 = vld [vmem:[%s1 + $0x1a0] sm:$0xf]
  %v141 = vld [vmem:[%s1 + $0x1a4] sm:$0xf]
  %v142 = vld [vmem:[%s1 + $0x1a8] sm:$0xf]
  %v143 = vld [vmem:[%s1 + $0x1ac] sm:$0xf]
  %v144 = vld [vmem:[%s1 + $0x1b0] sm:$0xf]
  %v145 = vld [vmem:[%s1 + $0x1b4] sm:$0xf]
  %v146 = vld [vmem:[%s1 + $0x1b8] sm:$0xf]
  %v147 = vld [vmem:[%s1 + $0x1bc] sm:$0xf]
  %v148 = vld [vmem:[%s1 + $0x1c0] sm:$0xf]
  %v149 = vld [vmem:[%s1 + $0x1c4] sm:$0xf]
  %v150 = vld [vmem:[%s1 + $0x1c8] sm:$0xf]
  %v151 = vld [vmem:[%s1 + $0x1cc] sm:$0xf]
  %v152 = vld [vmem:[%s1 + $0x1d0] sm:$0xf]
  %v153 = vld [vmem:[%s1 + $0x1d4] sm:$0xf]
  %v154 = vld [vmem:[%s1 + $0x1d8] sm:$0xf]
  %v155 = vld [vmem:[%s1 + $0x1dc] sm:$0xf]
  %v156 = vld [vmem:[%s1 + $0x1e0] sm:$0xf]
  %v157 = vld [vmem:[%s1 + $0x1e4] sm:$0xf]
  %v158 = vld [vmem:[%s1 + $0x1e8] sm:$0xf]
  %v159 = vld [vmem:[%s1 + $0x1ec] sm:$0xf]
  %v160 = vld [vmem:[%s1 + $0x1f0] sm:$0xf]
  %v161 = vld [vmem:[%s1 + $0x1f4] sm:$0xf]
  %v162 = vld [vmem:[%s1 + $0x1f8] sm:$0xf]
  %v163 = vld [vmem:[%s1 + $0x1fc] sm:$0xf]
  %v164 = vld [vmem:[%s1 + $0x200] sm:$0xf]
  %v165 = vld [vmem:[%s1 + $0x204] sm:$0xf]
  %v166 = vld [vmem:[%s1 + $0x208] sm:$0xf]
  %v167 = vld [vmem:[%s1 + $0x20c] sm:$0xf]
  %v168 = vld [vmem:[%s1 + $0x210] sm:$0xf]
  %v169 = vld [vmem:[%s1 + $0x214] sm:$0xf]
  %v170 = vld [vmem:[%s1 + $0x218] sm:$0xf]
  %v171 = vld [vmem:[%s1 + $0x21c] sm:$0xf]
  %v172 = vld [vmem:[%s1 + $0x220] sm:$0xf]
  %v173 = vld [vmem:[%s1 + $0x224] sm:$0xf]
  %v174 = vld [vmem:[%s1 + $0x228] sm:$0xf]
  %v175 = vld [vmem:[%s1 + $0x22c] sm:$0xf]
  %v176 = vld [vmem:[%s1 + $0x230] sm:$0xf]
  %v177 = vld [vmem:[%s1 + $0x234] sm:$0xf]
  %v178 = vld [vmem:[%s1 + $0x238] sm:$0xf]
  %v179 = vld [vmem:[%s1 + $0x23c] sm:$0xf]
  %v180 = vld [vmem:[%s1 + $0x240] sm:$0xf]
  %v181 = vld [vmem:[%s1 + $0x244] sm:$0xf]
  %v182 = vld [vmem:[%s1 + $0x248] sm:$0xf]
  %v183 = vld [vmem:[%s1 + $0x24c] sm:$0xf]
  %v184 = vld [vmem:[%s1 + $0x250] sm:$0xf]
  %v185 = vld [vmem:[%s1 + $0x254] sm:$0xf]
  %v186 = vld [vmem:[%s1 + $0x258] sm:$0xf]
  %v187 = vld [vmem:[%s1 + $0x25c] sm:$0xf]
  %v188 = vld [vmem:[%s1 + $0x260] sm:$0xf]
  %v189 = vld [vmem:[%s1 + $0x264] sm:$0xf]
  %v190 = vld [vmem:[%s1 + $0x268] sm:$0xf]
  %v191 = vld [vmem:[%s1 + $0x26c] sm:$0xf]
  %v192 = vld [vmem:[%s1 + $0x270] sm:$0xf]
  %v193 = vld [vmem:[%s1 + $0x274] sm:$0xf]
  %v194 = vld [vmem:[%s1 + $0x278] sm:$0xf]
  %v195 = vld [vmem:[%s1 + $0x27c] sm:$0xf]
  %v196 = vld [vmem:[%s1 + $0x280] sm:$0xf]
  %v197 = vld [vmem:[%s1 + $0x284] sm:$0xf]
  %v198 = vld [vmem:[%s1 + $0x288] sm:$0xf]
  %v199 = vld [vmem:[%s1 + $0x28c] sm:$0xf]
  %v200 = vld [vmem:[%s1 + $0x290] sm:$0xf]
  %v201 = vld [vmem:[%s1 + $0x294] sm:$0xf]
  %v202 = vld [vmem:[%s1 + $0x298] sm:$0xf]
  %v203 = vld [vmem:[%s1 + $0x29c] sm:$0xf]
  %v204 = vld [vmem:[%s1 + $0x2a0] sm:$0xf]
  %v205 = vld [vmem:[%s1 + $0x2a4] sm:$0xf]
  %v206 = vld [vmem:[%s1 + $0x2a8] sm:$0xf]
  %v207 = vld [vmem:[%s1 + $0x2ac] sm:$0xf]
  %v208 = vld [vmem:[%s1 + $0x2b0] sm:$0xf]
  %v209 = vld [vmem:[%s1 + $0x2b4] sm:$0xf]
  %v210 = vld [vmem:[%s1 + $0x2b8] sm:$0xf]
  %v211 = vld [vmem:[%s1 + $0x2bc] sm:$0xf]
  %v236 = vunpack.c.l.b16 %v12
  %v237 = vunpack.c.h.b16 %v12
  %v238 = vunpack.c.l.b16 %v13
  %v239 = vunpack.c.h.b16 %v13
  %v240 = vunpack.c.l.b16 %v14
  %v241 = vunpack.c.h.b16 %v14
  %v242 = vunpack.c.l.b16 %v15
  %v243 = vunpack.c.h.b16 %v15
  %v244 = vunpack.c.l.b16 %v16
  %v245 = vunpack.c.h.b16 %v16
  %v246 = vunpack.c.l.b16 %v17
  %v247 = vunpack.c.l.b16 %v18
  %v248 = vunpack.c.h.b16 %v18
  %v249 = vunpack.c.l.b16 %v19
  %v250 = vunpack.c.h.b16 %v19
  %v251 = vunpack.c.l.b16 %v20
  %v252 = vunpack.c.h.b16 %v20
  %v253 = vunpack.c.l.b16 %v21
  %v254 = vunpack.c.h.b16 %v21
  %v255 = vunpack.c.l.b16 %v22
  %v256 = vunpack.c.h.b16 %v22
  %v257 = vunpack.c.l.b16 %v23
  %v258 = vunpack.c.l.b16 %v24
  %v259 = vunpack.c.h.b16 %v24
  %v260 = vunpack.c.l.b16 %v25
  %v261 = vunpack.c.h.b16 %v25
  %v262 = vunpack.c.l.b16 %v26
  %v263 = vunpack.c.h.b16 %v26
  %v264 = vunpack.c.l.b16 %v27
  %v265 = vunpack.c.h.b16 %v27
  %v266 = vunpack.c.l.b16 %v28
  %v267 = vunpack.c.h.b16 %v28
  %v268 = vunpack.c.l.b16 %v29
  %v269 = vunpack.c.l.b16 %v30
  %v270 = vunpack.c.h.b16 %v30
  %v271 = vunpack.c.l.b16 %v31
  %v272 = vunpack.c.h.b16 %v31
  %v273 = vunpack.c.l.b16 %v32
  %v274 = vunpack.c.h.b16 %v32
  %v275 = vunpack.c.l.b16 %v33
  %v276 = vunpack.c.h.b16 %v33
  %v277 = vunpack.c.l.b16 %v34
  %v278 = vunpack.c.h.b16 %v34
  %v279 = vunpack.c.l.b16 %v35
  %v280 = vpack.c.b16 %v247, %v236
  %v281 = vpack.c.b16 %v248, %v237
  %v282 = vpack.c.b16 %v249, %v238
  %v283 = vpack.c.b16 %v250, %v239
  %v284 = vpack.c.b16 %v251, %v240
  %v285 = vpack.c.b16 %v252, %v241
  %v286 = vpack.c.b16 %v253, %v242
  %v287 = vpack.c.b16 %v254, %v243
  %v288 = vpack.c.b16 %v255, %v244
  %v289 = vpack.c.b16 %v256, %v245
  %v290 = vpack.c.b16 %v257, %v246
  %v291 = vpack.c.b16 %v269, %v258
  %v292 = vpack.c.b16 %v270, %v259
  %v293 = vpack.c.b16 %v271, %v260
  %v294 = vpack.c.b16 %v272, %v261
  %v295 = vpack.c.b16 %v273, %v262
  %v296 = vpack.c.b16 %v274, %v263
  %v297 = vpack.c.b16 %v275, %v264
  %v298 = vpack.c.b16 %v276, %v265
  %v299 = vpack.c.b16 %v277, %v266
  %v300 = vpack.c.b16 %v278, %v267
  %v301 = vpack.c.b16 %v279, %v268
  %v500 = vunpack.c.l.b16 %v36
  %v501 = vunpack.c.l.b16 %v37
  %v502 = vunpack.c.l.b16 %v38
  %v503 = vunpack.c.l.b16 %v39
  %v504 = vunpack.c.l.b16 %v40
  %v505 = vunpack.c.l.b16 %v41
  %v506 = vunpack.c.l.b16 %v42
  %v507 = vunpack.c.l.b16 %v43
  %v508 = vunpack.c.l.b16 %v44
  %v509 = vunpack.c.l.b16 %v45
  %v510 = vunpack.c.l.b16 %v46
  %v511 = vunpack.c.l.b16 %v47
  %v512 = vunpack.c.l.b16 %v48
  %v513 = vunpack.c.l.b16 %v49
  %v514 = vunpack.c.l.b16 %v50
  %v515 = vunpack.c.l.b16 %v51
  %v516 = vunpack.c.l.b16 %v52
  %v517 = vunpack.c.l.b16 %v53
  %v518 = vunpack.c.l.b16 %v54
  %v519 = vunpack.c.l.b16 %v55
  %v520 = vunpack.c.l.b16 %v56
  %v521 = vunpack.c.l.b16 %v57
  %v522 = vunpack.c.l.b16 %v58
  %v523 = vunpack.c.l.b16 %v59
  %v524 = vunpack.c.l.b16 %v60
  %v525 = vunpack.c.l.b16 %v61
  %v526 = vunpack.c.l.b16 %v62
  %v527 = vunpack.c.l.b16 %v63
  %v528 = vunpack.c.l.b16 %v64
  %v529 = vunpack.c.l.b16 %v65
  %v530 = vunpack.c.l.b16 %v66
  %v531 = vunpack.c.l.b16 %v67
  %v532 = vunpack.c.l.b16 %v68
  %v533 = vunpack.c.l.b16 %v69
  %v534 = vunpack.c.l.b16 %v70
  %v535 = vunpack.c.l.b16 %v71
  %v536 = vunpack.c.l.b16 %v72
  %v537 = vunpack.c.l.b16 %v73
  %v538 = vunpack.c.l.b16 %v74
  %v539 = vunpack.c.l.b16 %v75
  %v540 = vunpack.c.l.b16 %v76
  %v541 = vunpack.c.l.b16 %v77
  %v542 = vunpack.c.l.b16 %v78
  %v543 = vunpack.c.l.b16 %v79
  %v544 = vunpack.c.l.b16 %v80
  %v545 = vunpack.c.l.b16 %v81
  %v546 = vunpack.c.l.b16 %v82
  %v547 = vunpack.c.l.b16 %v83
  %v548 = vunpack.c.l.b16 %v84
  %v549 = vunpack.c.l.b16 %v85
  %v550 = vunpack.c.l.b16 %v86
  %v551 = vunpack.c.l.b16 %v87
  %v552 = vunpack.c.l.b16 %v88
  %v553 = vunpack.c.l.b16 %v89
  %v554 = vunpack.c.l.b16 %v90
  %v555 = vunpack.c.l.b16 %v91
  %v556 = vunpack.c.l.b16 %v92
  %v557 = vunpack.c.l.b16 %v93
  %v558 = vunpack.c.l.b16 %v94
  %v559 = vunpack.c.l.b16 %v95
  %v560 = vunpack.c.l.b16 %v96
  %v561 = vunpack.c.l.b16 %v97
  %v562 = vunpack.c.l.b16 %v98
  %v563 = vunpack.c.l.b16 %v99
  %v564 = vunpack.c.l.b16 %v100
  %v565 = vunpack.c.l.b16 %v101
  %v566 = vunpack.c.l.b16 %v102
  %v567 = vunpack.c.l.b16 %v103
  %v568 = vunpack.c.l.b16 %v104
  %v569 = vunpack.c.l.b16 %v105
  %v570 = vunpack.c.l.b16 %v106
  %v571 = vunpack.c.l.b16 %v107
  %v572 = vunpack.c.l.b16 %v108
  %v573 = vunpack.c.l.b16 %v109
  %v574 = vunpack.c.l.b16 %v110
  %v575 = vunpack.c.l.b16 %v111
  %v576 = vunpack.c.l.b16 %v112
  %v577 = vunpack.c.l.b16 %v113
  %v578 = vunpack.c.l.b16 %v114
  %v579 = vunpack.c.l.b16 %v115
  %v580 = vunpack.c.l.b16 %v116
  %v581 = vunpack.c.l.b16 %v117
  %v582 = vunpack.c.l.b16 %v118
  %v583 = vunpack.c.l.b16 %v119
  %v584 = vunpack.c.l.b16 %v120
  %v585 = vunpack.c.l.b16 %v121
  %v586 = vunpack.c.l.b16 %v122
  %v587 = vunpack.c.l.b16 %v123
  %v588 = vunpack.c.l.b16 %v124
  %v589 = vunpack.c.l.b16 %v125
  %v590 = vunpack.c.l.b16 %v126
  %v591 = vunpack.c.l.b16 %v127
  %v592 = vunpack.c.l.b16 %v128
  %v593 = vunpack.c.l.b16 %v129
  %v594 = vunpack.c.l.b16 %v130
  %v595 = vunpack.c.l.b16 %v131
  %v596 = vunpack.c.l.b16 %v132
  %v597 = vunpack.c.l.b16 %v133
  %v598 = vunpack.c.l.b16 %v134
  %v599 = vunpack.c.l.b16 %v135
  %v600 = vunpack.c.l.b16 %v136
  %v601 = vunpack.c.l.b16 %v137
  %v602 = vunpack.c.l.b16 %v138
  %v603 = vunpack.c.l.b16 %v139
  %v604 = vunpack.c.l.b16 %v140
  %v605 = vunpack.c.l.b16 %v141
  %v606 = vunpack.c.l.b16 %v142
  %v607 = vunpack.c.l.b16 %v143
  %v608 = vunpack.c.l.b16 %v144
  %v609 = vunpack.c.l.b16 %v145
  %v610 = vunpack.c.l.b16 %v146
  %v611 = vunpack.c.l.b16 %v147
  %v612 = vunpack.c.l.b16 %v148
  %v613 = vunpack.c.l.b16 %v149
  %v614 = vunpack.c.l.b16 %v150
  %v615 = vunpack.c.l.b16 %v151
  %v616 = vunpack.c.l.b16 %v152
  %v617 = vunpack.c.l.b16 %v153
  %v618 = vunpack.c.l.b16 %v154
  %v619 = vunpack.c.l.b16 %v155
  %v620 = vunpack.c.l.b16 %v156
  %v621 = vunpack.c.l.b16 %v157
  %v622 = vunpack.c.l.b16 %v158
  %v623 = vunpack.c.l.b16 %v159
  %v624 = vunpack.c.l.b16 %v160
  %v625 = vunpack.c.l.b16 %v161
  %v626 = vunpack.c.l.b16 %v162
  %v627 = vunpack.c.l.b16 %v163
  %v628 = vunpack.c.l.b16 %v164
  %v629 = vunpack.c.l.b16 %v165
  %v630 = vunpack.c.l.b16 %v166
  %v631 = vunpack.c.l.b16 %v167
  %v632 = vunpack.c.l.b16 %v168
  %v633 = vunpack.c.l.b16 %v169
  %v634 = vunpack.c.l.b16 %v170
  %v635 = vunpack.c.l.b16 %v171
  %v636 = vunpack.c.l.b16 %v172
  %v637 = vunpack.c.l.b16 %v173
  %v638 = vunpack.c.l.b16 %v174
  %v639 = vunpack.c.l.b16 %v175
  %v640 = vunpack.c.l.b16 %v176
  %v641 = vunpack.c.l.b16 %v177
  %v642 = vunpack.c.l.b16 %v178
  %v643 = vunpack.c.l.b16 %v179
  %v644 = vunpack.c.l.b16 %v180
  %v645 = vunpack.c.l.b16 %v181
  %v646 = vunpack.c.l.b16 %v182
  %v647 = vunpack.c.l.b16 %v183
  %v648 = vunpack.c.l.b16 %v184
  %v649 = vunpack.c.l.b16 %v185
  %v650 = vunpack.c.l.b16 %v186
  %v651 = vunpack.c.l.b16 %v187
  %v652 = vunpack.c.l.b16 %v188
  %v653 = vunpack.c.l.b16 %v189
  %v654 = vunpack.c.l.b16 %v190
  %v655 = vunpack.c.l.b16 %v191
  %v656 = vunpack.c.l.b16 %v192
  %v657 = vunpack.c.l.b16 %v193
  %v658 = vunpack.c.l.b16 %v194
  %v659 = vunpack.c.l.b16 %v195
  %v660 = vunpack.c.l.b16 %v196
  %v661 = vunpack.c.l.b16 %v197
  %v662 = vunpack.c.l.b16 %v198
  %v663 = vunpack.c.l.b16 %v199
  %v664 = vunpack.c.l.b16 %v200
  %v665 = vunpack.c.l.b16 %v201
  %v666 = vunpack.c.l.b16 %v202
  %v667 = vunpack.c.l.b16 %v203
  %v668 = vunpack.c.l.b16 %v204
  %v669 = vunpack.c.l.b16 %v205
  %v670 = vunpack.c.l.b16 %v206
  %v671 = vunpack.c.l.b16 %v207
  %v672 = vunpack.c.l.b16 %v208
  %v673 = vunpack.c.l.b16 %v209
  %v674 = vunpack.c.l.b16 %v210
  %v675 = vunpack.c.l.b16 %v211
  %v676 = vpack.c.b16 %v501, %v500
  %v677 = vpack.c.b16 %v503, %v502
  %v678 = vpack.c.b16 %v505, %v504
  %v679 = vpack.c.b16 %v507, %v506
  %v680 = vpack.c.b16 %v509, %v508
  %v681 = vpack.c.b16 %v511, %v510
  %v682 = vpack.c.b16 %v513, %v512
  %v683 = vpack.c.b16 %v515, %v514
  %v684 = vpack.c.b16 %v517, %v516
  %v685 = vpack.c.b16 %v519, %v518
  %v686 = vpack.c.b16 %v521, %v520
  %v687 = vpack.c.b16 %v523, %v522
  %v688 = vpack.c.b16 %v525, %v524
  %v689 = vpack.c.b16 %v527, %v526
  %v690 = vpack.c.b16 %v529, %v528
  %v691 = vpack.c.b16 %v531, %v530
  %v692 = vpack.c.b16 %v533, %v532
  %v693 = vpack.c.b16 %v535, %v534
  %v694 = vpack.c.b16 %v537, %v536
  %v695 = vpack.c.b16 %v539, %v538
  %v696 = vpack.c.b16 %v541, %v540
  %v697 = vpack.c.b16 %v543, %v542
  %v698 = vpack.c.b16 %v545, %v544
  %v699 = vpack.c.b16 %v547, %v546
  %v700 = vpack.c.b16 %v549, %v548
  %v701 = vpack.c.b16 %v551, %v550
  %v702 = vpack.c.b16 %v553, %v552
  %v703 = vpack.c.b16 %v555, %v554
  %v704 = vpack.c.b16 %v557, %v556
  %v705 = vpack.c.b16 %v559, %v558
  %v706 = vpack.c.b16 %v561, %v560
  %v707 = vpack.c.b16 %v563, %v562
  %v708 = vpack.c.b16 %v565, %v564
  %v709 = vpack.c.b16 %v567, %v566
  %v710 = vpack.c.b16 %v569, %v568
  %v711 = vpack.c.b16 %v571, %v570
  %v712 = vpack.c.b16 %v573, %v572
  %v713 = vpack.c.b16 %v575, %v574
  %v714 = vpack.c.b16 %v577, %v576
  %v715 = vpack.c.b16 %v579, %v578
  %v716 = vpack.c.b16 %v581, %v580
  %v717 = vpack.c.b16 %v583, %v582
  %v718 = vpack.c.b16 %v585, %v584
  %v719 = vpack.c.b16 %v587, %v586
  %v720 = vpack.c.b16 %v589, %v588
  %v721 = vpack.c.b16 %v591, %v590
  %v722 = vpack.c.b16 %v593, %v592
  %v723 = vpack.c.b16 %v595, %v594
  %v724 = vpack.c.b16 %v597, %v596
  %v725 = vpack.c.b16 %v599, %v598
  %v726 = vpack.c.b16 %v601, %v600
  %v727 = vpack.c.b16 %v603, %v602
  %v728 = vpack.c.b16 %v605, %v604
  %v729 = vpack.c.b16 %v607, %v606
  %v730 = vpack.c.b16 %v609, %v608
  %v731 = vpack.c.b16 %v611, %v610
  %v732 = vpack.c.b16 %v613, %v612
  %v733 = vpack.c.b16 %v615, %v614
  %v734 = vpack.c.b16 %v617, %v616
  %v735 = vpack.c.b16 %v619, %v618
  %v736 = vpack.c.b16 %v621, %v620
  %v737 = vpack.c.b16 %v623, %v622
  %v738 = vpack.c.b16 %v625, %v624
  %v739 = vpack.c.b16 %v627, %v626
  %v740 = vpack.c.b16 %v629, %v628
  %v741 = vpack.c.b16 %v631, %v630
  %v742 = vpack.c.b16 %v633, %v632
  %v743 = vpack.c.b16 %v635, %v634
  %v744 = vpack.c.b16 %v637, %v636
  %v745 = vpack.c.b16 %v639, %v638
  %v746 = vpack.c.b16 %v641, %v640
  %v747 = vpack.c.b16 %v643, %v642
  %v748 = vpack.c.b16 %v645, %v644
  %v749 = vpack.c.b16 %v647, %v646
  %v750 = vpack.c.b16 %v649, %v648
  %v751 = vpack.c.b16 %v651, %v650
  %v752 = vpack.c.b16 %v653, %v652
  %v753 = vpack.c.b16 %v655, %v654
  %v754 = vpack.c.b16 %v657, %v656
  %v755 = vpack.c.b16 %v659, %v658
  %v756 = vpack.c.b16 %v661, %v660
  %v757 = vpack.c.b16 %v663, %v662
  %v758 = vpack.c.b16 %v665, %v664
  %v759 = vpack.c.b16 %v667, %v666
  %v760 = vpack.c.b16 %v669, %v668
  %v761 = vpack.c.b16 %v671, %v670
  %v762 = vpack.c.b16 %v673, %v672
  %v763 = vpack.c.b16 %v675, %v674
  %852 = vmatprep.subr.bf16.mxu0 0
  %853 = vmatpush1.bf16.msra.mxu0 %v676
  %854 = vmatprep.subr.bf16.mxu0 0
  %855 = vmatpush1.bf16.msra.mxu0 %v677
  %856 = vmatprep.subr.bf16.mxu0 0
  %857 = vmatpush1.bf16.msra.mxu0 %v678
  %858 = vmatprep.subr.bf16.mxu0 0
  %859 = vmatpush1.bf16.msra.mxu0 %v679
  %860 = vmatprep.subr.bf16.mxu0 0
  %861 = vmatpush1.bf16.msra.mxu0 %v680
  %862 = vmatprep.subr.bf16.mxu0 0
  %863 = vmatpush1.bf16.msra.mxu0 %v681
  %864 = vmatprep.subr.bf16.mxu0 0
  %865 = vmatpush1.bf16.msra.mxu0 %v682
  %866 = vmatprep.subr.bf16.mxu0 0
  %867 = vmatpush1.bf16.msra.mxu0 %v683
  %868 = vmatprep.subr.bf16.mxu0 0
  %869 = vmatpush1.bf16.msra.mxu0 %v684
  %870 = vmatprep.subr.bf16.mxu0 0
  %871 = vmatpush1.bf16.msra.mxu0 %v685
  %872 = vmatprep.subr.bf16.mxu0 0
  %873 = vmatpush1.bf16.msra.mxu0 %v686
  %874 = vmatprep.subr.bf16.mxu0 0
  %875 = vmatpush1.bf16.msra.mxu0 %v687
  %876 = vmatprep.subr.bf16.mxu0 0
  %877 = vmatpush1.bf16.msra.mxu0 %v688
  %878 = vmatprep.subr.bf16.mxu0 0
  %879 = vmatpush1.bf16.msra.mxu0 %v689
  %880 = vmatprep.subr.bf16.mxu0 0
  %881 = vmatpush1.bf16.msra.mxu0 %v690
  %882 = vmatprep.subr.bf16.mxu0 0
  %883 = vmatpush1.bf16.msra.mxu0 %v691
  %884 = vmatprep.mubr.bf16.mxu0 %v281
  %885 = vmatmul.mubr.bf16.gmra.mrb[0].mxu0 %v280
  %v886 = vpop.f32.mrb[0].mxu0
  %v887 = vadd.f32 0.0, %v886
  %v888 = vpop.f32.mrb[0].mxu0
  %v889 = vpop.f32.mrb[0].mxu0
  %v890 = vadd.f32 0.0, %v889
  %v891 = vpop.f32.mrb[0].mxu0
  %892 = vmatprep.mubr.bf16.mxu0 %v292
  %893 = vmatmul.mubr.bf16.gmra.mrb[0].mxu0 %v291
  %v894 = vpop.f32.mrb[0].mxu0
  %v895 = vadd.f32 0.0, %v894
  %v896 = vpop.f32.mrb[0].mxu0
  %v897 = vpop.f32.mrb[0].mxu0
  %v898 = vadd.f32 0.0, %v897
  %v899 = vpop.f32.mrb[0].mxu0
  %900 = vdwg.mxu0
  %901 = vmatprep.subr.bf16.mxu0 0
  %902 = vmatpush1.bf16.msra.mxu0 %v692
  %903 = vmatprep.subr.bf16.mxu0 0
  %904 = vmatpush1.bf16.msra.mxu0 %v693
  %905 = vmatprep.subr.bf16.mxu0 0
  %906 = vmatpush1.bf16.msra.mxu0 %v694
  %907 = vmatprep.subr.bf16.mxu0 0
  %908 = vmatpush1.bf16.msra.mxu0 %v695
  %909 = vmatprep.subr.bf16.mxu0 0
  %910 = vmatpush1.bf16.msra.mxu0 %v696
  %911 = vmatprep.subr.bf16.mxu0 0
  %912 = vmatpush1.bf16.msra.mxu0 %v697
  %913 = vmatprep.subr.bf16.mxu0 0
  %914 = vmatpush1.bf16.msra.mxu0 %v698
  %915 = vmatprep.subr.bf16.mxu0 0
  %916 = vmatpush1.bf16.msra.mxu0 %v699
  %917 = vmatprep.subr.bf16.mxu0 0
  %918 = vmatpush1.bf16.msra.mxu0 %v700
  %919 = vmatprep.subr.bf16.mxu0 0
  %920 = vmatpush1.bf16.msra.mxu0 %v701
  %921 = vmatprep.subr.bf16.mxu0 0
  %922 = vmatpush1.bf16.msra.mxu0 %v702
  %923 = vmatprep.subr.bf16.mxu0 0
  %924 = vmatpush1.bf16.msra.mxu0 %v703
  %925 = vmatprep.subr.bf16.mxu0 0
  %926 = vmatpush1.bf16.msra.mxu0 %v704
  %927 = vmatprep.subr.bf16.mxu0 0
  %928 = vmatpush1.bf16.msra.mxu0 %v705
  %929 = vmatprep.subr.bf16.mxu0 0
  %930 = vmatpush1.bf16.msra.mxu0 %v706
  %931 = vmatprep.subr.bf16.mxu0 0
  %932 = vmatpush1.bf16.msra.mxu0 %v707
  %933 = vmatprep.mubr.bf16.mxu0 %v283
  %934 = vmatmul.mubr.bf16.gmra.mrb[0].mxu0 %v282
  %v935 = vpop.f32.mrb[0].mxu0
  %v936 = vadd.f32 %v887, %v935
  %v937 = vpop.f32.mrb[0].mxu0
  %v938 = vpop.f32.mrb[0].mxu0
  %v939 = vadd.f32 %v890, %v938
  %v940 = vpop.f32.mrb[0].mxu0
  %941 = vmatprep.mubr.bf16.mxu0 %v294
  %942 = vmatmul.mubr.bf16.gmra.mrb[0].mxu0 %v293
  %v943 = vpop.f32.mrb[0].mxu0
  %v944 = vadd.f32 %v895, %v943
  %v945 = vpop.f32.mrb[0].mxu0
  %v946 = vpop.f32.mrb[0].mxu0
  %v947 = vadd.f32 %v898, %v946
  %v948 = vpop.f32.mrb[0].mxu0
  %949 = vdwg.mxu0
  %950 = vmatprep.subr.bf16.mxu0 0
  %951 = vmatpush1.bf16.msra.mxu0 %v708
  %952 = vmatprep.subr.bf16.mxu0 0
  %953 = vmatpush1.bf16.msra.mxu0 %v709
  %954 = vmatprep.subr.bf16.mxu0 0
  %955 = vmatpush1.bf16.msra.mxu0 %v710
  %956 = vmatprep.subr.bf16.mxu0 0
  %957 = vmatpush1.bf16.msra.mxu0 %v711
  %958 = vmatprep.subr.bf16.mxu0 0
  %959 = vmatpush1.bf16.msra.mxu0 %v712
  %960 = vmatprep.subr.bf16.mxu0 0
  %961 = vmatpush1.bf16.msra.mxu0 %v713
  %962 = vmatprep.subr.bf16.mxu0 0
  %963 = vmatpush1.bf16.msra.mxu0 %v714
  %964 = vmatprep.subr.bf16.mxu0 0
  %965 = vmatpush1.bf16.msra.mxu0 %v715
  %966 = vmatprep.subr.bf16.mxu0 0
  %967 = vmatpush1.bf16.msra.mxu0 %v716
  %968 = vmatprep.subr.bf16.mxu0 0
  %969 = vmatpush1.bf16.msra.mxu0 %v717
  %970 = vmatprep.subr.bf16.mxu0 0
  %971 = vmatpush1.bf16.msra.mxu0 %v718
  %972 = vmatprep.subr.bf16.mxu0 0
  %973 = vmatpush1.bf16.msra.mxu0 %v719
  %974 = vmatprep.subr.bf16.mxu0 0
  %975 = vmatpush1.bf16.msra.mxu0 %v720
  %976 = vmatprep.subr.bf16.mxu0 0
  %977 = vmatpush1.bf16.msra.mxu0 %v721
  %978 = vmatprep.subr.bf16.mxu0 0
  %979 = vmatpush1.bf16.msra.mxu0 %v722
  %980 = vmatprep.subr.bf16.mxu0 0
  %981 = vmatpush1.bf16.msra.mxu0 %v723
  %982 = vmatprep.mubr.bf16.mxu0 %v285
  %983 = vmatmul.mubr.bf16.gmra.mrb[0].mxu0 %v284
  %v984 = vpop.f32.mrb[0].mxu0
  %v985 = vadd.f32 %v936, %v984
  %v986 = vpop.f32.mrb[0].mxu0
  %v987 = vpop.f32.mrb[0].mxu0
  %v988 = vadd.f32 %v939, %v987
  %v989 = vpop.f32.mrb[0].mxu0
  %990 = vmatprep.mubr.bf16.mxu0 %v296
  %991 = vmatmul.mubr.bf16.gmra.mrb[0].mxu0 %v295
  %v992 = vpop.f32.mrb[0].mxu0
  %v993 = vadd.f32 %v944, %v992
  %v994 = vpop.f32.mrb[0].mxu0
  %v995 = vpop.f32.mrb[0].mxu0
  %v996 = vadd.f32 %v947, %v995
  %v997 = vpop.f32.mrb[0].mxu0
  %998 = vdwg.mxu0
  %999 = vmatprep.subr.bf16.mxu0 0
  %1000 = vmatpush1.bf16.msra.mxu0 %v724
  %1001 = vmatprep.subr.bf16.mxu0 0
  %1002 = vmatpush1.bf16.msra.mxu0 %v725
  %1003 = vmatprep.subr.bf16.mxu0 0
  %1004 = vmatpush1.bf16.msra.mxu0 %v726
  %1005 = vmatprep.subr.bf16.mxu0 0
  %1006 = vmatpush1.bf16.msra.mxu0 %v727
  %1007 = vmatprep.subr.bf16.mxu0 0
  %1008 = vmatpush1.bf16.msra.mxu0 %v728
  %1009 = vmatprep.subr.bf16.mxu0 0
  %1010 = vmatpush1.bf16.msra.mxu0 %v729
  %1011 = vmatprep.subr.bf16.mxu0 0
  %1012 = vmatpush1.bf16.msra.mxu0 %v730
  %1013 = vmatprep.subr.bf16.mxu0 0
  %1014 = vmatpush1.bf16.msra.mxu0 %v731
  %1015 = vmatprep.subr.bf16.mxu0 0
  %1016 = vmatpush1.bf16.msra.mxu0 %v732
  %1017 = vmatprep.subr.bf16.mxu0 0
  %1018 = vmatpush1.bf16.msra.mxu0 %v733
  %1019 = vmatprep.subr.bf16.mxu0 0
  %1020 = vmatpush1.bf16.msra.mxu0 %v734
  %1021 = vmatprep.subr.bf16.mxu0 0
  %1022 = vmatpush1.bf16.msra.mxu0 %v735
  %1023 = vmatprep.subr.bf16.mxu0 0
  %1024 = vmatpush1.bf16.msra.mxu0 %v736
  %1025 = vmatprep.subr.bf16.mxu0 0
  %1026 = vmatpush1.bf16.msra.mxu0 %v737
  %1027 = vmatprep.subr.bf16.mxu0 0
  %1028 = vmatpush1.bf16.msra.mxu0 %v738
  %1029 = vmatprep.subr.bf16.mxu0 0
  %1030 = vmatpush1.bf16.msra.mxu0 %v739
  %1031 = vmatprep.mubr.bf16.mxu0 %v287
  %1032 = vmatmul.mubr.bf16.gmra.mrb[0].mxu0 %v286
  %v1033 = vpop.f32.mrb[0].mxu0
  %v1034 = vadd.f32 %v985, %v1033
  %v1035 = vpop.f32.mrb[0].mxu0
  %v1036 = vpop.f32.mrb[0].mxu0
  %v1037 = vadd.f32 %v988, %v1036
  %v1038 = vpop.f32.mrb[0].mxu0
  %1039 = vmatprep.mubr.bf16.mxu0 %v298
  %1040 = vmatmul.mubr.bf16.gmra.mrb[0].mxu0 %v297
  %v1041 = vpop.f32.mrb[0].mxu0
  %v1042 = vadd.f32 %v993, %v1041
  %v1043 = vpop.f32.mrb[0].mxu0
  %v1044 = vpop.f32.mrb[0].mxu0
  %v1045 = vadd.f32 %v996, %v1044
  %v1046 = vpop.f32.mrb[0].mxu0
  %1047 = vdwg.mxu0
  %1048 = vmatprep.subr.bf16.mxu0 0
  %1049 = vmatpush1.bf16.msra.mxu0 %v740
  %1050 = vmatprep.subr.bf16.mxu0 0
  %1051 = vmatpush1.bf16.msra.mxu0 %v741
  %1052 = vmatprep.subr.bf16.mxu0 0
  %1053 = vmatpush1.bf16.msra.mxu0 %v742
  %1054 = vmatprep.subr.bf16.mxu0 0
  %1055 = vmatpush1.bf16.msra.mxu0 %v743
  %1056 = vmatprep.subr.bf16.mxu0 0
  %1057 = vmatpush1.bf16.msra.mxu0 %v744
  %1058 = vmatprep.subr.bf16.mxu0 0
  %1059 = vmatpush1.bf16.msra.mxu0 %v745
  %1060 = vmatprep.subr.bf16.mxu0 0
  %1061 = vmatpush1.bf16.msra.mxu0 %v746
  %1062 = vmatprep.subr.bf16.mxu0 0
  %1063 = vmatpush1.bf16.msra.mxu0 %v747
  %1064 = vmatprep.subr.bf16.mxu0 0
  %1065 = vmatpush1.bf16.msra.mxu0 %v748
  %1066 = vmatprep.subr.bf16.mxu0 0
  %1067 = vmatpush1.bf16.msra.mxu0 %v749
  %1068 = vmatprep.subr.bf16.mxu0 0
  %1069 = vmatpush1.bf16.msra.mxu0 %v750
  %1070 = vmatprep.subr.bf16.mxu0 0
  %1071 = vmatpush1.bf16.msra.mxu0 %v751
  %1072 = vmatprep.subr.bf16.mxu0 0
  %1073 = vmatpush1.bf16.msra.mxu0 %v752
  %1074 = vmatprep.subr.bf16.mxu0 0
  %1075 = vmatpush1.bf16.msra.mxu0 %v753
  %1076 = vmatprep.subr.bf16.mxu0 0
  %1077 = vmatpush1.bf16.msra.mxu0 %v754
  %1078 = vmatprep.subr.bf16.mxu0 0
  %1079 = vmatpush1.bf16.msra.mxu0 %v755
  %1080 = vmatprep.mubr.bf16.mxu0 %v289
  %1081 = vmatmul.mubr.bf16.gmra.mrb[0].mxu0 %v288
  %v1082 = vpop.f32.mrb[0].mxu0
  %v1083 = vadd.f32 %v1034, %v1082
  %v1084 = vpop.f32.mrb[0].mxu0
  %v1085 = vpop.f32.mrb[0].mxu0
  %v1086 = vadd.f32 %v1037, %v1085
  %v1087 = vpop.f32.mrb[0].mxu0
  %1088 = vmatprep.mubr.bf16.mxu0 %v300
  %1089 = vmatmul.mubr.bf16.gmra.mrb[0].mxu0 %v299
  %v1090 = vpop.f32.mrb[0].mxu0
  %v1091 = vadd.f32 %v1042, %v1090
  %v1092 = vpop.f32.mrb[0].mxu0
  %v1093 = vpop.f32.mrb[0].mxu0
  %v1094 = vadd.f32 %v1045, %v1093
  %v1095 = vpop.f32.mrb[0].mxu0
  %1096 = vdwg.mxu0
  %1097 = vmatprep.subr.bf16.mxu0 0
  %1098 = vmatpush1.bf16.msra.mxu0 %v756
  %1099 = vmatprep.subr.bf16.mxu0 0
  %1100 = vmatpush1.bf16.msra.mxu0 %v757
  %1101 = vmatprep.subr.bf16.mxu0 0
  %1102 = vmatpush1.bf16.msra.mxu0 %v758
  %1103 = vmatprep.subr.bf16.mxu0 0
  %1104 = vmatpush1.bf16.msra.mxu0 %v759
  %1105 = vmatprep.subr.bf16.mxu0 0
  %1106 = vmatpush1.bf16.msra.mxu0 %v760
  %1107 = vmatprep.subr.bf16.mxu0 0
  %1108 = vmatpush1.bf16.msra.mxu0 %v761
  %1109 = vmatprep.subr.bf16.mxu0 0
  %1110 = vmatpush1.bf16.msra.mxu0 %v762
  %1111 = vmatprep.subr.bf16.mxu0 0
  %1112 = vmatpush1.bf16.msra.mxu0 %v763
  %1113 = vmatprep.subr.bf16.mxu0 0
  %1114 = vmatpush1.bf16.msra.mxu0 0
  %1115 = vmatprep.subr.bf16.mxu0 0
  %1116 = vmatpush1.bf16.msra.mxu0 0
  %1117 = vmatprep.subr.bf16.mxu0 0
  %1118 = vmatpush1.bf16.msra.mxu0 0
  %1119 = vmatprep.subr.bf16.mxu0 0
  %1120 = vmatpush1.bf16.msra.mxu0 0
  %1121 = vmatprep.subr.bf16.mxu0 0
  %1122 = vmatpush1.bf16.msra.mxu0 0
  %1123 = vmatprep.subr.bf16.mxu0 0
  %1124 = vmatpush1.bf16.msra.mxu0 0
  %1125 = vmatprep.subr.bf16.mxu0 0
  %1126 = vmatpush1.bf16.msra.mxu0 0
  %1127 = vmatprep.subr.bf16.mxu0 0
  %1128 = vmatpush1.bf16.msra.mxu0 0
  %1129 = vmatprep.mubr.bf16.mxu0 0
  %1130 = vmatmul.mubr.bf16.gmra.mrb[0].mxu0 %v290
  %v1131 = vpop.f32.mrb[0].mxu0
  %v1132 = vadd.f32 %v1083, %v1131
  %v1133 = vpop.f32.mrb[0].mxu0
  %v1134 = vpop.f32.mrb[0].mxu0
  %v1135 = vadd.f32 %v1086, %v1134
  %v1136 = vpop.f32.mrb[0].mxu0
  %1137 = vmatprep.mubr.bf16.mxu0 0
  %1138 = vmatmul.mubr.bf16.gmra.mrb[0].mxu0 %v301
  %v1139 = vpop.f32.mrb[0].mxu0
  %v1140 = vadd.f32 %v1091, %v1139
  %v1141 = vpop.f32.mrb[0].mxu0
  %v1142 = vpop.f32.mrb[0].mxu0
  %v1143 = vadd.f32 %v1094, %v1142
  %v1144 = vpop.f32.mrb[0].mxu0
  %1145 = vdwg.mxu0
  %1146 = vst [vmem:[%s2] sm:$0xff] %v1132
  %1147 = vst [vmem:[%s2 + $0x8] sm:$0xff] %v1135
  %1148 = vst [vmem:[%s2 + $0x10] sm:$0xff] %v1140
  %1149 = vst [vmem:[%s2 + $0x18] sm:$0xff] %v1143
  // Predicated region
  $region10: #{_forward_impl.1} parent=0 // pred_check
    _
  $region11: #{_forward_impl.1} parent=0 // pred_check_branch
    %1151 = sbr.rel (0) target = $region13
  $region12: #{_forward_impl.1} parent=0 // pred_region
    _
  $region13: #{_forward_impl.1} parent=0 // pred_fallthru
    _
  // Predicated region
  $region14: #{_forward_impl.1} parent=0 // pred_check
    _
  $region15: #{_forward_impl.1} parent=0 // pred_check_branch
    %1153 = sbr.rel (0) target = $region17
  $region16: #{_forward_impl.1} parent=0 // pred_region
    _
  $region17: #{_forward_impl.1} parent=0 // pred_fallthru
    _

</llo_original>
